<compile_context>
chip_gen: v5e
topology: v5e:2x2
jax: 0.10.0
libtpu: 0.0.40
codegen_flags: <defaults>
</compile_context>

<pallas_src>
import jax
import jax.numpy as jnp
from jax.experimental import pallas as pl
from jax.experimental.pallas import tpu as pltpu


def _round_up(x, m):
    return (x + m - 1) // m * m


# ----------------------------- shared MLP body ------------------------------
def _mlp(x, w1, b1, w2, b2, w3, b3, w4, b4):
    """DenseNet([3,64,128,256,D], ReLU): Linear/ReLU x3 + Linear, f32 accum."""
    h = jnp.dot(x, w1, preferred_element_type=jnp.float32) + b1
    h = jnp.maximum(h, 0.0)
    h = jnp.dot(h, w2, preferred_element_type=jnp.float32) + b2
    h = jnp.maximum(h, 0.0)
    h = jnp.dot(h, w3, preferred_element_type=jnp.float32) + b3
    h = jnp.maximum(h, 0.0)
    return jnp.dot(h, w4, preferred_element_type=jnp.float32) + b4


# ------------- pass 1: psi-MLP fused with the reduction over N --------------
def _psi_accum_kernel(a_ref, vt_ref,
                      w1, b1, w2, b2, w3, b3, w4, b4,
                      u_ref):
    nt = pl.program_id(1)

    @pl.when(nt == 0)
    def _():
        u_ref[...] = jnp.zeros_like(u_ref)

    psi = _mlp(a_ref[0], w1[...], b1[...], w2[...], b2[...],
               w3[...], b3[...], w4[...], b4[...])            # (tile_m, D)
    vt = vt_ref[0]                                            # (I, tile_m)
    # u_full[i, d] += sum_m v[m, i] * psi[m, d]   (standard MXU matmul)
    u_ref[0] += jnp.dot(vt, psi, preferred_element_type=jnp.float32)


# ------------- pass 2: phi-MLP fused with the output contraction ------------
def _phi_out_kernel(a_ref, su_ref,
                    w1, b1, w2, b2, w3, b3, w4, b4,
                    out_ref):
    phi = _mlp(a_ref[0], w1[...], b1[...], w2[...], b2[...],
               w3[...], b3[...], w4[...], b4[...])            # (tile_m, D)
    # out[m, o] = sum_d phi[m, d] * Su[d, o]      (1/n already folded into Su)
    out = jnp.dot(phi, su_ref[0], preferred_element_type=jnp.float32)
    out_ref[0] = out.astype(out_ref.dtype)


def _full_spec(p):
    # whole 2-D weight/bias resident (constant block index -> no re-DMA)
    return pl.BlockSpec(p.shape, lambda b, nt: (0, 0))


# ------------------------------ module wrapper ------------------------------
def init_mlp(dims, key):
    params = []
    for i in range(len(dims) - 1):
        key, kw, kb = jax.random.split(key, 3)
        bound = 1.0 / (dims[i] ** 0.5)
        w = jax.random.uniform(kw, (dims[i], dims[i + 1]), jnp.float32, -bound, bound)
        b = jax.random.uniform(kb, (1, dims[i + 1]), jnp.float32, -bound, bound)
        params.append((w, b))
    return params


class LowRank2d:
    def __init__(self, in_channels, out_channels, s, width, rank, key):
        self.in_channels = in_channels
        self.out_channels = out_channels
        self.s = s
        self.n = s * s
        self.rank = rank
        d_out = width * width * rank
        dims = [3, 64, 128, 256, d_out]
        k_phi, k_psi = jax.random.split(key)
        self.phi_params = init_mlp(dims, k_phi)
        self.psi_params = init_mlp(dims, k_psi)

    def __call__(self, v, a, *, tile_m=256):
        B, N, I = v.shape
        O, R = self.out_channels, self.rank
        assert N == self.n and I == self.in_channels
        D = O * I * R

        # Row tiling: multiple of 8, multiple of 128 whenever it tiles N_pad.
        tile_m = min(tile_m, _round_up(N, 8))
        n_pad = _round_up(N, tile_m)
        n_tiles = n_pad // tile_m
        if n_pad != N:
            # zero-padded v rows contribute nothing to the pass-1 reduction;
            # padded pass-2 output rows are sliced off below.
            a_p = jnp.pad(a, ((0, 0), (0, n_pad - N), (0, 0)))
            v_p = jnp.pad(v, ((0, 0), (0, n_pad - N), (0, 0)))
        else:
            a_p, v_p = a, v
        # tiny transpose of v only (B*N*I elems) so the kernel matmul is a
        # plain (I, tile_m) @ (tile_m, D) contraction; the big psi/phi arrays
        # are never materialized/transposed in HBM.
        vt_p = jnp.swapaxes(v_p, 1, 2)                        # (B, I, n_pad)

        psi_flat = [p for wb in self.psi_params for p in wb]
        phi_flat = [p for wb in self.phi_params for p in wb]

        # ---- pass 1: u_full[b,i,d] = sum_k v[b,k,i] * psi(a)[b,k,d] ----
        u_full = pl.pallas_call(
            _psi_accum_kernel,
            grid=(B, n_tiles),
            in_specs=[pl.BlockSpec((1, tile_m, 3), lambda b, nt: (b, nt, 0)),
                      pl.BlockSpec((1, I, tile_m), lambda b, nt: (b, 0, nt))]
                     + [_full_spec(p) for p in psi_flat],
            out_specs=pl.BlockSpec((1, I, D), lambda b, nt: (b, 0, 0)),
            out_shape=jax.ShapeDtypeStruct((B, I, D), jnp.float32),
            compiler_params=pltpu.CompilerParams(
                dimension_semantics=("parallel", "arbitrary")),
        )(a_p, vt_p, *psi_flat)

        # ---- tiny host-side reshuffle: diagonal pick + block-diagonal Su ----
        uf = u_full.reshape(B, I, O, I, R)
        u = jnp.diagonal(uf, axis1=1, axis2=3)                # (B, O, R, I)
        u = jnp.transpose(u, (0, 1, 3, 2)).reshape(B, D)      # (B, O*I*R)
        blk = jnp.arange(D) // (I * R)
        onehot = (blk[:, None] == jnp.arange(O)[None, :]).astype(jnp.float32)
        su = (u[:, :, None] * onehot[None, :, :]) * (1.0 / float(self.n))  # (B, D, O)

        # ---- pass 2: out[b,m,o] = phi(a)[b,m,:] @ Su[b] ----
        out_pad = pl.pallas_call(
            _phi_out_kernel,
            grid=(B, n_tiles),
            in_specs=[pl.BlockSpec((1, tile_m, 3), lambda b, nt: (b, nt, 0)),
                      pl.BlockSpec((1, D, O), lambda b, nt: (b, 0, 0))]
                     + [_full_spec(p) for p in phi_flat],
            out_specs=pl.BlockSpec((1, tile_m, O), lambda b, nt: (b, nt, 0)),
            out_shape=jax.ShapeDtypeStruct((B, n_pad, O), v.dtype),
            compiler_params=pltpu.CompilerParams(
                dimension_semantics=("parallel", "parallel")),
        )(a_p, su, *phi_flat)

        return out_pad[:, :N, :]                              # (B, N, O) == 'bmo'


# -------------------------------- reference --------------------------------
def _mlp_ref(x, params):
    h = x
    for w, b in params[:-1]:
        h = jnp.maximum(h @ w + b, 0.0)
    w, b = params[-1]
    return h @ w + b


def reference(v, a, model):
    B, N, I = v.shape
    O, R = model.out_channels, model.rank
    a_flat = a.reshape(B * N, -1)
    phi_eval = _mlp_ref(a_flat, model.phi_params).reshape(B, N, O, I, R)
    psi_eval = _mlp_ref(a_flat, model.psi_params).reshape(B, N, O, I, R)
    return jnp.einsum('bnoir,bni,bmoir->bmo', psi_eval, v, phi_eval) / model.n


if __name__ == "__main__":
    key = jax.random.PRNGKey(0)
    k_param, k_v, k_a = jax.random.split(key, 3)
    B, width, rank, s = 2, 4, 2, 8
    in_ch = out_ch = width
    n = s * s
    model = LowRank2d(in_ch, out_ch, s, width, rank, k_param)
    v = jax.random.normal(k_v, (B, n, in_ch), dtype=jnp.float32)
    a = jax.random.normal(k_a, (B, n, 3), dtype=jnp.float32)

    out = model(v, a)
    out = jax.block_until_ready(out)

    ref = reference(v, a, model)
    assert out.shape == (B, n, out_ch), out.shape
    err = float(jnp.max(jnp.abs(out - ref)))
    assert jnp.allclose(out, ref, atol=1e-3, rtol=1e-3), err
    print("KERNEL_OK")
</pallas_src>

<mosaic_0001>
module attributes {stable_mosaic.version = 11 : i64} {
  func.func @_psi_accum_kernel(%arg0: i32, %arg1: i32, %arg2: memref<1x64x3xf32, #tpu.memory_space<vmem>>, %arg3: memref<1x4x64xf32, #tpu.memory_space<vmem>>, %arg4: memref<3x64xf32, #tpu.memory_space<vmem>>, %arg5: memref<1x64xf32, #tpu.memory_space<vmem>>, %arg6: memref<64x128xf32, #tpu.memory_space<vmem>>, %arg7: memref<1x128xf32, #tpu.memory_space<vmem>>, %arg8: memref<128x256xf32, #tpu.memory_space<vmem>>, %arg9: memref<1x256xf32, #tpu.memory_space<vmem>>, %arg10: memref<256x32xf32, #tpu.memory_space<vmem>>, %arg11: memref<1x32xf32, #tpu.memory_space<vmem>>, %arg12: memref<1x4x32xf32, #tpu.memory_space<vmem>>) attributes {dimension_semantics = [#tpu.dimension_semantics<parallel>, #tpu.dimension_semantics<arbitrary>], iteration_bounds = array<i64: 2, 1>, scalar_prefetch = 0 : i64, scratch_operands = 0 : i64, tpu.core_type = #tpu.core_type<tc>, window_params = [{transform_indices = @transform_0, window_bounds = array<i64: 1, 64, 3>}, {transform_indices = @transform_1, window_bounds = array<i64: 1, 4, 64>}, {pipeline_mode = #tpu.pipeline_mode<synchronous>, transform_indices = @transform_2, window_bounds = array<i64: 3, 64>}, {pipeline_mode = #tpu.pipeline_mode<synchronous>, transform_indices = @transform_3, window_bounds = array<i64: 1, 64>}, {pipeline_mode = #tpu.pipeline_mode<synchronous>, transform_indices = @transform_4, window_bounds = array<i64: 64, 128>}, {pipeline_mode = #tpu.pipeline_mode<synchronous>, transform_indices = @transform_5, window_bounds = array<i64: 1, 128>}, {pipeline_mode = #tpu.pipeline_mode<synchronous>, transform_indices = @transform_6, window_bounds = array<i64: 128, 256>}, {pipeline_mode = #tpu.pipeline_mode<synchronous>, transform_indices = @transform_7, window_bounds = array<i64: 1, 256>}, {pipeline_mode = #tpu.pipeline_mode<synchronous>, transform_indices = @transform_8, window_bounds = array<i64: 256, 32>}, {pipeline_mode = #tpu.pipeline_mode<synchronous>, transform_indices = @transform_9, window_bounds = array<i64: 1, 32>}, {transform_indices = @transform_10, window_bounds = array<i64: 1, 4, 32>}]} {
    %c0_i32 = arith.constant 0 : i32
    %0 = arith.cmpi eq, %arg1, %c0_i32 : i32
    %1 = arith.extui %0 : i1 to i32
    %c0_i32_0 = arith.constant 0 : i32
    %2 = arith.cmpi ne, %1, %c0_i32_0 : i32
    scf.if %2 {
      %cst_35 = arith.constant 0.000000e+00 : f32
      %40 = vector.broadcast %cst_35 : f32 to vector<1x4x32xf32>
      %c0_36 = arith.constant 0 : index
      %c0_37 = arith.constant 0 : index
      %c0_38 = arith.constant 0 : index
      %41 = vector.load %arg12[%c0_36, %c0_37, %c0_38] : memref<1x4x32xf32, #tpu.memory_space<vmem>>, vector<1x4x32xf32>
      tpu.vector_store %arg12[%c0_36, %c0_37, %c0_38], %40 {strides = array<i32>} : memref<1x4x32xf32, #tpu.memory_space<vmem>>, vector<1x4x32xf32>,
    } else {
    }
    %c0 = arith.constant 0 : index
    %c0_1 = arith.constant 0 : index
    %c0_2 = arith.constant 0 : index
    %3 = vector.load %arg2[%c0, %c0_1, %c0_2] : memref<1x64x3xf32, #tpu.memory_space<vmem>>, vector<1x64x3xf32>
    %4 = vector.shape_cast %3 : vector<1x64x3xf32> to vector<64x3xf32>
    %c0_3 = arith.constant 0 : index
    %c0_4 = arith.constant 0 : index
    %5 = vector.load %arg4[%c0_3, %c0_4] : memref<3x64xf32, #tpu.memory_space<vmem>>, vector<3x64xf32>
    %c0_5 = arith.constant 0 : index
    %c0_6 = arith.constant 0 : index
    %6 = vector.load %arg5[%c0_5, %c0_6] : memref<1x64xf32, #tpu.memory_space<vmem>>, vector<1x64xf32>
    %c0_7 = arith.constant 0 : index
    %c0_8 = arith.constant 0 : index
    %7 = vector.load %arg6[%c0_7, %c0_8] : memref<64x128xf32, #tpu.memory_space<vmem>>, vector<64x128xf32>
    %c0_9 = arith.constant 0 : index
    %c0_10 = arith.constant 0 : index
    %8 = vector.load %arg7[%c0_9, %c0_10] : memref<1x128xf32, #tpu.memory_space<vmem>>, vector<1x128xf32>
    %c0_11 = arith.constant 0 : index
    %c0_12 = arith.constant 0 : index
    %9 = vector.load %arg8[%c0_11, %c0_12] : memref<128x256xf32, #tpu.memory_space<vmem>>, vector<128x256xf32>
    %c0_13 = arith.constant 0 : index
    %c0_14 = arith.constant 0 : index
    %10 = vector.load %arg9[%c0_13, %c0_14] : memref<1x256xf32, #tpu.memory_space<vmem>>, vector<1x256xf32>
    %c0_15 = arith.constant 0 : index
    %c0_16 = arith.constant 0 : index
    %11 = vector.load %arg10[%c0_15, %c0_16] : memref<256x32xf32, #tpu.memory_space<vmem>>, vector<256x32xf32>
    %c0_17 = arith.constant 0 : index
    %c0_18 = arith.constant 0 : index
    %12 = vector.load %arg11[%c0_17, %c0_18] : memref<1x32xf32, #tpu.memory_space<vmem>>, vector<1x32xf32>
    %cst = arith.constant dense<0.000000e+00> : vector<64x64xf32>
    %13 = tpu.matmul %4, %5, %cst {dimension_numbers = #tpu.dot_dimension_numbers<[1], [0], [0], [1], [0, 0, 1, 1], [], []>} : vector<64x3xf32>, vector<3x64xf32>, vector<64x64xf32> -> vector<64x64xf32>
    %14 = vector.broadcast %6 : vector<1x64xf32> to vector<64x64xf32>
    %15 = arith.addf %13, %14 : vector<64x64xf32>
    %cst_19 = arith.constant 0.000000e+00 : f32
    %16 = vector.broadcast %cst_19 : f32 to vector<64x64xf32>
    %17 = arith.maximumf %15, %16 : vector<64x64xf32>
    %cst_20 = arith.constant dense<0.000000e+00> : vector<64x128xf32>
    %18 = tpu.matmul %17, %7, %cst_20 {dimension_numbers = #tpu.dot_dimension_numbers<[1], [0], [0], [1], [0, 0, 1, 1], [], []>} : vector<64x64xf32>, vector<64x128xf32>, vector<64x128xf32> -> vector<64x128xf32>
    %19 = vector.broadcast %8 : vector<1x128xf32> to vector<64x128xf32>
    %20 = arith.addf %18, %19 : vector<64x128xf32>
    %cst_21 = arith.constant 0.000000e+00 : f32
    %21 = vector.broadcast %cst_21 : f32 to vector<64x128xf32>
    %22 = arith.maximumf %20, %21 : vector<64x128xf32>
    %cst_22 = arith.constant dense<0.000000e+00> : vector<64x256xf32>
    %23 = tpu.matmul %22, %9, %cst_22 {dimension_numbers = #tpu.dot_dimension_numbers<[1], [0], [0], [1], [0, 0, 1, 1], [], []>} : vector<64x128xf32>, vector<128x256xf32>, vector<64x256xf32> -> vector<64x256xf32>
    %24 = vector.broadcast %10 : vector<1x256xf32> to vector<64x256xf32>
    %25 = arith.addf %23, %24 : vector<64x256xf32>
    %cst_23 = arith.constant 0.000000e+00 : f32
    %26 = vector.broadcast %cst_23 : f32 to vector<64x256xf32>
    %27 = arith.maximumf %25, %26 : vector<64x256xf32>
    %cst_24 = arith.constant dense<0.000000e+00> : vector<64x32xf32>
    %28 = tpu.matmul %27, %11, %cst_24 {dimension_numbers = #tpu.dot_dimension_numbers<[1], [0], [0], [1], [0, 0, 1, 1], [], []>} : vector<64x256xf32>, vector<256x32xf32>, vector<64x32xf32> -> vector<64x32xf32>
    %29 = vector.broadcast %12 : vector<1x32xf32> to vector<64x32xf32>
    %30 = arith.addf %28, %29 : vector<64x32xf32>
    %c0_25 = arith.constant 0 : index
    %c0_26 = arith.constant 0 : index
    %c0_27 = arith.constant 0 : index
    %31 = vector.load %arg3[%c0_25, %c0_26, %c0_27] : memref<1x4x64xf32, #tpu.memory_space<vmem>>, vector<1x4x64xf32>
    %32 = vector.shape_cast %31 : vector<1x4x64xf32> to vector<4x64xf32>
    %c0_28 = arith.constant 0 : index
    %c0_29 = arith.constant 0 : index
    %c0_30 = arith.constant 0 : index
    %33 = vector.load %arg12[%c0_28, %c0_29, %c0_30] : memref<1x4x32xf32, #tpu.memory_space<vmem>>, vector<1x4x32xf32>
    %34 = vector.shape_cast %33 : vector<1x4x32xf32> to vector<4x32xf32>
    %cst_31 = arith.constant dense<0.000000e+00> : vector<4x32xf32>
    %35 = tpu.matmul %32, %30, %cst_31 {dimension_numbers = #tpu.dot_dimension_numbers<[1], [0], [0], [1], [0, 0, 1, 1], [], []>} : vector<4x64xf32>, vector<64x32xf32>, vector<4x32xf32> -> vector<4x32xf32>
    %36 = arith.addf %34, %35 : vector<4x32xf32>
    %c0_32 = arith.constant 0 : index
    %c0_33 = arith.constant 0 : index
    %c0_34 = arith.constant 0 : index
    %37 = vector.load %arg12[%c0_32, %c0_33, %c0_34] : memref<1x4x32xf32, #tpu.memory_space<vmem>>, vector<1x4x32xf32>
    %38 = vector.shape_cast %37 : vector<1x4x32xf32> to vector<4x32xf32>
    %39 = vector.shape_cast %36 : vector<4x32xf32> to vector<1x4x32xf32>
    tpu.vector_store %arg12[%c0_32, %c0_33, %c0_34], %39 {strides = array<i32>} : memref<1x4x32xf32, #tpu.memory_space<vmem>>, vector<1x4x32xf32>,
    return
  }
  func.func @transform_0(%arg0: i32, %arg1: i32) -> (i32, i32, i32) {
    %c0_i32 = arith.constant 0 : i32
    %c0_i32_0 = arith.constant 0 : i32
    return %arg0, %arg1, %c0_i32 : i32, i32, i32
  }
  func.func @transform_1(%arg0: i32, %arg1: i32) -> (i32, i32, i32) {
    %c0_i32 = arith.constant 0 : i32
    %c0_i32_0 = arith.constant 0 : i32
    return %arg0, %c0_i32, %arg1 : i32, i32, i32
  }
  func.func @transform_2(%arg0: i32, %arg1: i32) -> (i32, i32) {
    %c0_i32 = arith.constant 0 : i32
    %c0_i32_0 = arith.constant 0 : i32
    %c0_i32_1 = arith.constant 0 : i32
    return %c0_i32, %c0_i32_0 : i32, i32
  }
  func.func @transform_3(%arg0: i32, %arg1: i32) -> (i32, i32) {
    %c0_i32 = arith.constant 0 : i32
    %c0_i32_0 = arith.constant 0 : i32
    %c0_i32_1 = arith.constant 0 : i32
    return %c0_i32, %c0_i32_0 : i32, i32
  }
  func.func @transform_4(%arg0: i32, %arg1: i32) -> (i32, i32) {
    %c0_i32 = arith.constant 0 : i32
    %c0_i32_0 = arith.constant 0 : i32
    %c0_i32_1 = arith.constant 0 : i32
    return %c0_i32, %c0_i32_0 : i32, i32
  }
  func.func @transform_5(%arg0: i32, %arg1: i32) -> (i32, i32) {
    %c0_i32 = arith.constant 0 : i32
    %c0_i32_0 = arith.constant 0 : i32
    %c0_i32_1 = arith.constant 0 : i32
    return %c0_i32, %c0_i32_0 : i32, i32
  }
  func.func @transform_6(%arg0: i32, %arg1: i32) -> (i32, i32) {
    %c0_i32 = arith.constant 0 : i32
    %c0_i32_0 = arith.constant 0 : i32
    %c0_i32_1 = arith.constant 0 : i32
    return %c0_i32, %c0_i32_0 : i32, i32
  }
  func.func @transform_7(%arg0: i32, %arg1: i32) -> (i32, i32) {
    %c0_i32 = arith.constant 0 : i32
    %c0_i32_0 = arith.constant 0 : i32
    %c0_i32_1 = arith.constant 0 : i32
    return %c0_i32, %c0_i32_0 : i32, i32
  }
  func.func @transform_8(%arg0: i32, %arg1: i32) -> (i32, i32) {
    %c0_i32 = arith.constant 0 : i32
    %c0_i32_0 = arith.constant 0 : i32
    %c0_i32_1 = arith.constant 0 : i32
    return %c0_i32, %c0_i32_0 : i32, i32
  }
  func.func @transform_9(%arg0: i32, %arg1: i32) -> (i32, i32) {
    %c0_i32 = arith.constant 0 : i32
    %c0_i32_0 = arith.constant 0 : i32
    %c0_i32_1 = arith.constant 0 : i32
    return %c0_i32, %c0_i32_0 : i32, i32
  }
  func.func @transform_10(%arg0: i32, %arg1: i32) -> (i32, i32, i32) {
    %c0_i32 = arith.constant 0 : i32
    %c0_i32_0 = arith.constant 0 : i32
    %c0_i32_1 = arith.constant 0 : i32
    return %arg0, %c0_i32, %c0_i32_0 : i32, i32, i32
  }
}

</mosaic_0001>

<llo_original>
// kernel: tpu_custom_call.1
$region0: #{tpu_custom_call.1}
  #allocation0 [shape = 'u32[]', space=smem, size = 0x4, offset = 0x4, fixed_abs, tag = 'smem constant byte address 0x4 - core index']
  #allocation1 [shape = 'u32[72,128]{1,0:T(1,128)}', space=vmem, size = 0x9000, scoped, tag = 'internal scratch']
  %s0 = inlined_call_operand.vmem [shape: f32[2,64,3], index: 0, kind: input, shape index: {}]
  %s1 = inlined_call_operand.vmem [shape: f32[2,4,64], index: 1, kind: input, shape index: {}]
  %s2 = inlined_call_operand.vmem [shape: f32[3,64], index: 2, kind: input, shape index: {}]
  %s3 = inlined_call_operand.vmem [shape: f32[1,64], index: 3, kind: input, shape index: {}]
  %s4 = inlined_call_operand.vmem [shape: f32[64,128], index: 4, kind: input, shape index: {}]
  %s5 = inlined_call_operand.vmem [shape: f32[1,128], index: 5, kind: input, shape index: {}]
  %s6 = inlined_call_operand.vmem [shape: f32[128,256], index: 6, kind: input, shape index: {}]
  %s7 = inlined_call_operand.vmem [shape: f32[1,256], index: 7, kind: input, shape index: {}]
  %s8 = inlined_call_operand.vmem [shape: f32[256,32], index: 8, kind: input, shape index: {}]
  %s9 = inlined_call_operand.vmem [shape: f32[1,32], index: 9, kind: input, shape index: {}]
  %s10 = inlined_call_operand.hbm [shape: f32[2,4,32], index: 10, kind: output, shape index: {}]
  %s11 = sld [smem:[#allocation0]]
  $region77: #{tpu_custom_call.1} parent=0
    _
  %s13 = ssub.s32 1, %s11
  %s14 = scalar_select 0, %s13, %s11
  $region1: #{tpu_custom_call.1} parent=0
    #allocation2 [shape = 'u8[4096]{0}', space=vmem, size = 0x1000, scoped, tag = 'output window, operand 0']
    #allocation3 [shape = 's32[2]{0}', space=sflag, size = 0x8, scoped, tag = 'scoped memory for tpu_custom_call.1']
    %15 = vsyncpa [#allocation3], 0
    %s16 = scalar_lea.sflag [#allocation3], 1
    %17 = vsyncpa %s16, 0
    loop: start=0, step=1, limit=4
    $region2: #{tpu_custom_call.1} parent=1 // loop_pre_header
      _
    $region3: #{tpu_custom_call.1} parent=1 // loop_header
      %s19 = sphi 0, %s23
      %p20 = scmp.ge.s32.totalorder %s19, 4
      %s26 = sphi 0, %s38
      %s27 = sphi 0, %s34
      %s28 = sphi 0, %s26
      %s29 = sphi 0, %s27
      %s30 = sphi 0, %s28
      %s31 = sphi 0, %s29
      %s43 = sphi 0, %s45
      %s46 = sphi 0, %s43
      %s47 = sphi 0, %s46
      %s63 = sphi 0, %s47
      %s71 = sphi 0, %s73
      %s74 = sphi 0, %s71
      %s75 = sphi 0, %s74
      %s91 = sphi 0, %s75
      %s95 = sphi 0, %s95
      %s97 = sphi 0, %s95
      %s98 = sphi 0, %s97
      %s112 = sphi 0, %s98
      %s116 = sphi 0, %s116
      %s118 = sphi 0, %s116
      %s119 = sphi 0, %s118
      %s133 = sphi 0, %s119
      %s137 = sphi 0, %s137
      %s139 = sphi 0, %s137
      %s140 = sphi 0, %s139
      %s154 = sphi 0, %s140
      %s158 = sphi 0, %s158
      %s160 = sphi 0, %s158
      %s161 = sphi 0, %s160
      %s175 = sphi 0, %s161
      %s179 = sphi 0, %s179
      %s181 = sphi 0, %s179
      %s182 = sphi 0, %s181
      %s196 = sphi 0, %s182
      %s200 = sphi 0, %s200
      %s202 = sphi 0, %s200
      %s203 = sphi 0, %s202
      %s217 = sphi 0, %s203
      %s221 = sphi 0, %s221
      %s223 = sphi 0, %s221
      %s224 = sphi 0, %s223
      %s238 = sphi 0, %s224
      %s242 = sphi 0, %s242
      %s244 = sphi 0, %s242
      %s245 = sphi 0, %s244
      %s259 = sphi 0, %s245
      %s265 = sphi 0, %s267
      %s268 = sphi 0, %s265
      %s269 = sphi 0, %s268
      %s285 = sphi 0, %s269
    $region4: #{tpu_custom_call.1} parent=1 // loop_header_branch
      %22 = sbr.rel (%p20) target = $region8
    $region5: #{tpu_custom_call.1} parent=1 // loop_body
      %s24 = ssub.s32 %s19, 1
      %s25 = ssub.s32 %s19, 2
      %s32 = sadd.s32 1, %s27
      %p33 = scmp.ge.s32.totalorder %s32, 1
      %s34 = scalar_select %p33, 0, %s32
      %s35 = sadd.s32 1, %s26
      %s36 = scalar_select %p33, %s35, %s26
      %p37 = scmp.ge.s32.totalorder %s36, 2
      %s38 = scalar_select %p37, 0, %s36
      %s39 = ssub.s32 %s26, %s38
      %s40 = ssub.s32 %s27, %s34
      %s41 = sor.u32 %s39, %s40
      %p42 = scmp.eq.s32.totalorder %s41, 0
      %s44 = sadd.s32 %s43, 1
      %s45 = scalar_select %p42, %s43, %s44
      %p48 = pneg %p42
      %p49 = scmp.eq.s32.totalorder %s19, 1
      %p50 = por %p48, %p49
      %p51 = scmp.ne.s32.totalorder %s43, %s46
      %p52 = scmp.eq.s32.totalorder %s19, 0
      %p53 = por %p51, %p52
      %p54 = scmp.ne.s32.totalorder %s43, %s46
      %p55 = scmp.eq.s32.totalorder %s24, 1
      %p56 = por %p54, %p55
      %p57 = scmp.ne.s32.totalorder %s46, %s47
      %p58 = scmp.eq.s32.totalorder %s24, 0
      %p59 = por %p57, %p58
      %p60 = scmp.ne.s32.totalorder %s46, %s47
      %p61 = scmp.eq.s32.totalorder %s25, 1
      %p62 = por %p60, %p61
      %p64 = scmp.ne.s32.totalorder %s47, %s63
      %p65 = scmp.eq.s32.totalorder %s25, 0
      %p66 = por %p64, %p65
      %s67 = ssub.s32 %s26, %s38
      %s68 = ssub.s32 %s27, %s34
      %s69 = sor.u32 %s67, %s68
      %p70 = scmp.eq.s32.totalorder %s69, 0
      %s72 = sadd.s32 %s71, 1
      %s73 = scalar_select %p70, %s71, %s72
      %p76 = pneg %p70
      %p77 = scmp.eq.s32.totalorder %s19, 1
      %p78 = por %p76, %p77
      %p79 = scmp.ne.s32.totalorder %s71, %s74
      %p80 = scmp.eq.s32.totalorder %s19, 0
      %p81 = por %p79, %p80
      %p82 = scmp.ne.s32.totalorder %s71, %s74
      %p83 = scmp.eq.s32.totalorder %s24, 1
      %p84 = por %p82, %p83
      %p85 = scmp.ne.s32.totalorder %s74, %s75
      %p86 = scmp.eq.s32.totalorder %s24, 0
      %p87 = por %p85, %p86
      %p88 = scmp.ne.s32.totalorder %s74, %s75
      %p89 = scmp.eq.s32.totalorder %s25, 1
      %p90 = por %p88, %p89
      %p92 = scmp.ne.s32.totalorder %s75, %s91
      %p93 = scmp.eq.s32.totalorder %s25, 0
      %p94 = por %p92, %p93
      %s96 = sadd.s32 %s95, 1
      %p99 = scmp.eq.s32.totalorder %s19, 1
      %p100 = scmp.ne.s32.totalorder %s95, %s97
      %p101 = scmp.eq.s32.totalorder %s19, 0
      %p102 = por %p100, %p101
      %p103 = scmp.ne.s32.totalorder %s95, %s97
      %p104 = scmp.eq.s32.totalorder %s24, 1
      %p105 = por %p103, %p104
      %p106 = scmp.ne.s32.totalorder %s97, %s98
      %p107 = scmp.eq.s32.totalorder %s24, 0
      %p108 = por %p106, %p107
      %p109 = scmp.ne.s32.totalorder %s97, %s98
      %p110 = scmp.eq.s32.totalorder %s25, 1
      %p111 = por %p109, %p110
      %p113 = scmp.ne.s32.totalorder %s98, %s112
      %p114 = scmp.eq.s32.totalorder %s25, 0
      %p115 = por %p113, %p114
      %s117 = sadd.s32 %s116, 1
      %p120 = scmp.eq.s32.totalorder %s19, 1
      %p121 = scmp.ne.s32.totalorder %s116, %s118
      %p122 = scmp.eq.s32.totalorder %s19, 0
      %p123 = por %p121, %p122
      %p124 = scmp.ne.s32.totalorder %s116, %s118
      %p125 = scmp.eq.s32.totalorder %s24, 1
      %p126 = por %p124, %p125
      %p127 = scmp.ne.s32.totalorder %s118, %s119
      %p128 = scmp.eq.s32.totalorder %s24, 0
      %p129 = por %p127, %p128
      %p130 = scmp.ne.s32.totalorder %s118, %s119
      %p131 = scmp.eq.s32.totalorder %s25, 1
      %p132 = por %p130, %p131
      %p134 = scmp.ne.s32.totalorder %s119, %s133
      %p135 = scmp.eq.s32.totalorder %s25, 0
      %p136 = por %p134, %p135
      %s138 = sadd.s32 %s137, 1
      %p141 = scmp.eq.s32.totalorder %s19, 1
      %p142 = scmp.ne.s32.totalorder %s137, %s139
      %p143 = scmp.eq.s32.totalorder %s19, 0
      %p144 = por %p142, %p143
      %p145 = scmp.ne.s32.totalorder %s137, %s139
      %p146 = scmp.eq.s32.totalorder %s24, 1
      %p147 = por %p145, %p146
      %p148 = scmp.ne.s32.totalorder %s139, %s140
      %p149 = scmp.eq.s32.totalorder %s24, 0
      %p150 = por %p148, %p149
      %p151 = scmp.ne.s32.totalorder %s139, %s140
      %p152 = scmp.eq.s32.totalorder %s25, 1
      %p153 = por %p151, %p152
      %p155 = scmp.ne.s32.totalorder %s140, %s154
      %p156 = scmp.eq.s32.totalorder %s25, 0
      %p157 = por %p155, %p156
      %s159 = sadd.s32 %s158, 1
      %p162 = scmp.eq.s32.totalorder %s19, 1
      %p163 = scmp.ne.s32.totalorder %s158, %s160
      %p164 = scmp.eq.s32.totalorder %s19, 0
      %p165 = por %p163, %p164
      %p166 = scmp.ne.s32.totalorder %s158, %s160
      %p167 = scmp.eq.s32.totalorder %s24, 1
      %p168 = por %p166, %p167
      %p169 = scmp.ne.s32.totalorder %s160, %s161
      %p170 = scmp.eq.s32.totalorder %s24, 0
      %p171 = por %p169, %p170
      %p172 = scmp.ne.s32.totalorder %s160, %s161
      %p173 = scmp.eq.s32.totalorder %s25, 1
      %p174 = por %p172, %p173
      %p176 = scmp.ne.s32.totalorder %s161, %s175
      %p177 = scmp.eq.s32.totalorder %s25, 0
      %p178 = por %p176, %p177
      %s180 = sadd.s32 %s179, 1
      %p183 = scmp.eq.s32.totalorder %s19, 1
      %p184 = scmp.ne.s32.totalorder %s179, %s181
      %p185 = scmp.eq.s32.totalorder %s19, 0
      %p186 = por %p184, %p185
      %p187 = scmp.ne.s32.totalorder %s179, %s181
      %p188 = scmp.eq.s32.totalorder %s24, 1
      %p189 = por %p187, %p188
      %p190 = scmp.ne.s32.totalorder %s181, %s182
      %p191 = scmp.eq.s32.totalorder %s24, 0
      %p192 = por %p190, %p191
      %p193 = scmp.ne.s32.totalorder %s181, %s182
      %p194 = scmp.eq.s32.totalorder %s25, 1
      %p195 = por %p193, %p194
      %p197 = scmp.ne.s32.totalorder %s182, %s196
      %p198 = scmp.eq.s32.totalorder %s25, 0
      %p199 = por %p197, %p198
      %s201 = sadd.s32 %s200, 1
      %p204 = scmp.eq.s32.totalorder %s19, 1
      %p205 = scmp.ne.s32.totalorder %s200, %s202
      %p206 = scmp.eq.s32.totalorder %s19, 0
      %p207 = por %p205, %p206
      %p208 = scmp.ne.s32.totalorder %s200, %s202
      %p209 = scmp.eq.s32.totalorder %s24, 1
      %p210 = por %p208, %p209
      %p211 = scmp.ne.s32.totalorder %s202, %s203
      %p212 = scmp.eq.s32.totalorder %s24, 0
      %p213 = por %p211, %p212
      %p214 = scmp.ne.s32.totalorder %s202, %s203
      %p215 = scmp.eq.s32.totalorder %s25, 1
      %p216 = por %p214, %p215
      %p218 = scmp.ne.s32.totalorder %s203, %s217
      %p219 = scmp.eq.s32.totalorder %s25, 0
      %p220 = por %p218, %p219
      %s222 = sadd.s32 %s221, 1
      %p225 = scmp.eq.s32.totalorder %s19, 1
      %p226 = scmp.ne.s32.totalorder %s221, %s223
      %p227 = scmp.eq.s32.totalorder %s19, 0
      %p228 = por %p226, %p227
      %p229 = scmp.ne.s32.totalorder %s221, %s223
      %p230 = scmp.eq.s32.totalorder %s24, 1
      %p231 = por %p229, %p230
      %p232 = scmp.ne.s32.totalorder %s223, %s224
      %p233 = scmp.eq.s32.totalorder %s24, 0
      %p234 = por %p232, %p233
      %p235 = scmp.ne.s32.totalorder %s223, %s224
      %p236 = scmp.eq.s32.totalorder %s25, 1
      %p237 = por %p235, %p236
      %p239 = scmp.ne.s32.totalorder %s224, %s238
      %p240 = scmp.eq.s32.totalorder %s25, 0
      %p241 = por %p239, %p240
      %s243 = sadd.s32 %s242, 1
      %p246 = scmp.eq.s32.totalorder %s19, 1
      %p247 = scmp.ne.s32.totalorder %s242, %s244
      %p248 = scmp.eq.s32.totalorder %s19, 0
      %p249 = por %p247, %p248
      %p250 = scmp.ne.s32.totalorder %s242, %s244
      %p251 = scmp.eq.s32.totalorder %s24, 1
      %p252 = por %p250, %p251
      %p253 = scmp.ne.s32.totalorder %s244, %s245
      %p254 = scmp.eq.s32.totalorder %s24, 0
      %p255 = por %p253, %p254
      %p256 = scmp.ne.s32.totalorder %s244, %s245
      %p257 = scmp.eq.s32.totalorder %s25, 1
      %p258 = por %p256, %p257
      %p260 = scmp.ne.s32.totalorder %s245, %s259
      %p261 = scmp.eq.s32.totalorder %s25, 0
      %p262 = por %p260, %p261
      %s263 = ssub.s32 %s26, %s38
      %p264 = scmp.eq.s32.totalorder %s263, 0
      %s266 = sadd.s32 %s265, 1
      %s267 = scalar_select %p264, %s265, %s266
      %p270 = pneg %p264
      %p271 = scmp.eq.s32.totalorder %s19, 1
      %p272 = por %p270, %p271
      %p273 = scmp.ne.s32.totalorder %s265, %s268
      %p274 = scmp.eq.s32.totalorder %s19, 0
      %p275 = por %p273, %p274
      %p276 = scmp.ne.s32.totalorder %s265, %s268
      %p277 = scmp.eq.s32.totalorder %s24, 1
      %p278 = por %p276, %p277
      %p279 = scmp.ne.s32.totalorder %s268, %s269
      %p280 = scmp.eq.s32.totalorder %s24, 0
      %p281 = por %p279, %p280
      %p282 = scmp.ne.s32.totalorder %s268, %s269
      %p283 = scmp.eq.s32.totalorder %s25, 1
      %p284 = por %p282, %p283
      %p286 = scmp.ne.s32.totalorder %s269, %s285
      %p287 = scmp.eq.s32.totalorder %s25, 0
      %p288 = por %p286, %p287
      %p289 = scmp.le.s32.totalorder 1, %s19
      %p290 = scmp.lt.s32.totalorder %s19, 3
      %p291 = pnand %p289, %p290
      %p292 = pneg %p291
      // Predicated region
      $region9: #{tpu_custom_call.1} parent=5 // pred_check
        _
      $region10: #{tpu_custom_call.1} parent=5 // pred_check_branch
        %294 = sbr.rel (%p291) target = $region12
      $region11: #{tpu_custom_call.1} parent=5 // pred_region
        %s295 = ssub.s32 %s19, 1
        // Predicated region
        $region13: #{tpu_custom_call.1} parent=11 // pred_check
          %p296 = pneg %p108
        $region14: #{tpu_custom_call.1} parent=11 // pred_check_branch
          %298 = sbr.rel (%p296) target = $region16
        $region15: #{tpu_custom_call.1} parent=11 // pred_region
          _
        $region16: #{tpu_custom_call.1} parent=11 // pred_fallthru
          _
        // Predicated region
        $region17: #{tpu_custom_call.1} parent=11 // pred_check
          %p299 = pneg %p129
        $region18: #{tpu_custom_call.1} parent=11 // pred_check_branch
          %301 = sbr.rel (%p299) target = $region20
        $region19: #{tpu_custom_call.1} parent=11 // pred_region
          _
        $region20: #{tpu_custom_call.1} parent=11 // pred_fallthru
          _
        // Predicated region
        $region21: #{tpu_custom_call.1} parent=11 // pred_check
          %p302 = pneg %p150
        $region22: #{tpu_custom_call.1} parent=11 // pred_check_branch
          %304 = sbr.rel (%p302) target = $region24
        $region23: #{tpu_custom_call.1} parent=11 // pred_region
          _
        $region24: #{tpu_custom_call.1} parent=11 // pred_fallthru
          _
        // Predicated region
        $region25: #{tpu_custom_call.1} parent=11 // pred_check
          %p305 = pneg %p171
        $region26: #{tpu_custom_call.1} parent=11 // pred_check_branch
          %307 = sbr.rel (%p305) target = $region28
        $region27: #{tpu_custom_call.1} parent=11 // pred_region
          _
        $region28: #{tpu_custom_call.1} parent=11 // pred_fallthru
          _
        // Predicated region
        $region29: #{tpu_custom_call.1} parent=11 // pred_check
          %p308 = pneg %p192
        $region30: #{tpu_custom_call.1} parent=11 // pred_check_branch
          %310 = sbr.rel (%p308) target = $region32
        $region31: #{tpu_custom_call.1} parent=11 // pred_region
          _
        $region32: #{tpu_custom_call.1} parent=11 // pred_fallthru
          _
        // Predicated region
        $region33: #{tpu_custom_call.1} parent=11 // pred_check
          %p311 = pneg %p213
        $region34: #{tpu_custom_call.1} parent=11 // pred_check_branch
          %313 = sbr.rel (%p311) target = $region36
        $region35: #{tpu_custom_call.1} parent=11 // pred_region
          _
        $region36: #{tpu_custom_call.1} parent=11 // pred_fallthru
          _
        // Predicated region
        $region37: #{tpu_custom_call.1} parent=11 // pred_check
          %p314 = pneg %p234
        $region38: #{tpu_custom_call.1} parent=11 // pred_check_branch
          %316 = sbr.rel (%p314) target = $region40
        $region39: #{tpu_custom_call.1} parent=11 // pred_region
          _
        $region40: #{tpu_custom_call.1} parent=11 // pred_fallthru
          _
        // Predicated region
        $region41: #{tpu_custom_call.1} parent=11 // pred_check
          %p317 = pneg %p255
        $region42: #{tpu_custom_call.1} parent=11 // pred_check_branch
          %319 = sbr.rel (%p317) target = $region44
        $region43: #{tpu_custom_call.1} parent=11 // pred_region
          _
        $region44: #{tpu_custom_call.1} parent=11 // pred_fallthru
          _
      $region12: #{tpu_custom_call.1} parent=5 // pred_fallthru
        _
      %p320 = scmp.lt.s32.totalorder %s19, 2
      // Predicated region
      $region45: #{tpu_custom_call.1} parent=5 // pred_check
        %p321 = pneg %p320
      $region46: #{tpu_custom_call.1} parent=5 // pred_check_branch
        %323 = sbr.rel (%p321) target = $region48
      $region47: #{tpu_custom_call.1} parent=5 // pred_region
        // Predicated region
        $region49: #{tpu_custom_call.1} parent=47 // pred_check
          %p324 = pneg %p53
        $region50: #{tpu_custom_call.1} parent=47 // pred_check_branch
          %326 = sbr.rel (%p324) target = $region52
        $region51: #{tpu_custom_call.1} parent=47 // pred_region
          %s327 = smul.u32 8, %s27
          %p328 = scmp.lt.s32.totalorder %s26, 1
          %s329 = scalar_select %p328, %s26, 1
          %p330 = scmp.lt.s32.totalorder %s327, 7
          %s331 = scalar_select %p330, %s327, 7
          %s332 = smul.addr %s329, 8
          %s333 = sadd.s32 %s331, %s332
          %s334 = smul.addr %s333, 8
          %s335 = scalar_lea.vmem %s0, %s334
          %s336 = smul.u32 8, %s27
        $region52: #{tpu_custom_call.1} parent=47 // pred_fallthru
          _
        // Predicated region
        $region53: #{tpu_custom_call.1} parent=47 // pred_check
          %p337 = pneg %p81
        $region54: #{tpu_custom_call.1} parent=47 // pred_check_branch
          %339 = sbr.rel (%p337) target = $region56
        $region55: #{tpu_custom_call.1} parent=47 // pred_region
          %p340 = scmp.lt.s32.totalorder %s26, 1
          %s341 = scalar_select %p340, %s26, 1
          %p342 = scmp.lt.s32.totalorder %s27, 0
          %s343 = scalar_select %p342, %s27, 0
          %s344 = sadd.s32 %s343, %s341
          %s345 = smul.addr %s344, 4
          %s346 = scalar_lea.vmem %s1, %s345
        $region56: #{tpu_custom_call.1} parent=47 // pred_fallthru
          _
      $region48: #{tpu_custom_call.1} parent=5 // pred_fallthru
        _
      %p347 = scmp.le.s32.totalorder 1, %s19
      %p348 = scmp.lt.s32.totalorder %s19, 3
      %p349 = pnand %p347, %p348
      %p350 = pneg %p349
      // Predicated region
      $region57: #{tpu_custom_call.1} parent=5 // pred_check
        _
      $region58: #{tpu_custom_call.1} parent=5 // pred_check_branch
        %352 = sbr.rel (%p349) target = $region60
      $region59: #{tpu_custom_call.1} parent=5 // pred_region
        %s353 = ssub.s32 %s19, 1
        %s354 = smul.u32 8, %s29
        %p355 = scmp.lt.s32.totalorder %s28, 1
        %s356 = scalar_select %p355, %s28, 1
        %p357 = scmp.lt.s32.totalorder %s354, 7
        %s358 = scalar_select %p357, %s354, 7
        %s359 = smul.addr %s356, 8
        %s360 = sadd.s32 %s358, %s359
        %s361 = smul.addr %s360, 8
        %s362 = scalar_lea.vmem %s0, %s361
        %p363 = pneg %p59
        %p364 = pneg %p56
        %p365 = scmp.lt.s32.totalorder %s28, 1
        %s366 = scalar_select %p365, %s28, 1
        %p367 = scmp.lt.s32.totalorder %s29, 0
        %s368 = scalar_select %p367, %s29, 0
        %s369 = sadd.s32 %s368, %s366
        %s370 = smul.addr %s369, 4
        %s371 = scalar_lea.vmem %s1, %s370
        %p372 = pneg %p87
        %p373 = pneg %p84
        %p374 = pneg %p108
        %p375 = pneg %p105
        %p376 = pneg %p129
        %p377 = pneg %p126
        %p378 = pneg %p150
        %p379 = pneg %p147
        %p380 = pneg %p171
        %p381 = pneg %p168
        %p382 = pneg %p192
        %p383 = pneg %p189
        %p384 = pneg %p213
        %p385 = pneg %p210
        %p386 = pneg %p234
        %p387 = pneg %p231
        %p388 = pneg %p255
        %p389 = pneg %p252
        %p390 = pneg %p281
        %p391 = pneg %p278
        %s392 = sand.u32 %s268, 1
        %s393 = scalar_lea.sflag [#allocation3], %s392
        %s394 = sand.u32 %s268, 1
        %s395 = smul.addr %s394, 4
        %s396 = scalar_lea.vmem [#allocation2], %s395
        %s397 = smul.u32 8, %s29
        %p398 = scmp.lt.s32.totalorder %s28, 1
        %s399 = scalar_select %p398, %s28, 1
        %p400 = scmp.lt.s32.totalorder %s397, 7
        %s401 = scalar_select %p400, %s397, 7
        %s402 = smul.addr %s399, 8
        %s403 = sadd.s32 %s401, %s402
        %s404 = smul.addr %s403, 8
        %s405 = scalar_lea.vmem %s0, %s404
        %s406 = smul.u32 8, %s29
        %p407 = scmp.lt.s32.totalorder %s28, 1
        %s408 = scalar_select %p407, %s28, 1
        %p409 = scmp.lt.s32.totalorder %s29, 0
        %s410 = scalar_select %p409, %s29, 0
        %s411 = sadd.s32 %s410, %s408
        %s412 = smul.addr %s411, 4
        %s413 = scalar_lea.vmem %s1, %s412
        %p414 = scmp.eq.s32.totalorder %s29, 0
        // Predicated region
        $region61: #{tpu_custom_call.1} parent=59 // pred_check
          %p415 = pneg %p414
        $region62: #{tpu_custom_call.1} parent=59 // pred_check_branch
          %417 = sbr.rel (%p415) target = $region64
        $region63: #{tpu_custom_call.1} parent=59 // pred_region
          %vm418 = vcmask 257024
          %419 = vst.msk [vmem:[%s396] sm:$0xf] %vm418, 0.0
        $region64: #{tpu_custom_call.1} parent=59 // pred_fallthru
          _
        %v420 = vld [vmem:[%s405] sm:$0xff]
        %v421 = vld [vmem:[%s405 + $0x8] sm:$0xff]
        %v422 = vld [vmem:[%s405 + $0x10] sm:$0xff]
        %v423 = vld [vmem:[%s405 + $0x18] sm:$0xff]
        %v424 = vld [vmem:[%s405 + $0x20] sm:$0xff]
        %v425 = vld [vmem:[%s405 + $0x28] sm:$0xff]
        %v426 = vld [vmem:[%s405 + $0x30] sm:$0xff]
        %v427 = vld [vmem:[%s405 + $0x38] sm:$0xff]
        %v428 = vld [vmem:[%s2] sm:$0x7]
        %v429 = vld [vmem:[%s3] sm:$0x1]
        %v430 = vld [vmem:[%s4] sm:$0xff]
        %v431 = vld [vmem:[%s4 + $0x8] sm:$0xff]
        %v432 = vld [vmem:[%s4 + $0x10] sm:$0xff]
        %v433 = vld [vmem:[%s4 + $0x18] sm:$0xff]
        %v434 = vld [vmem:[%s4 + $0x20] sm:$0xff]
        %v435 = vld [vmem:[%s4 + $0x28] sm:$0xff]
        %v436 = vld [vmem:[%s4 + $0x30] sm:$0xff]
        %v437 = vld [vmem:[%s4 + $0x38] sm:$0xff]
        %v438 = vld [vmem:[%s5] sm:$0x1]
        %v439 = vld [vmem:[%s6] sm:$0xff]
        %v440 = vld [vmem:[%s6 + $0x8] sm:$0xff]
        %v441 = vld [vmem:[%s6 + $0x10] sm:$0xff]
        %v442 = vld [vmem:[%s6 + $0x18] sm:$0xff]
        %v443 = vld [vmem:[%s6 + $0x20] sm:$0xff]
        %v444 = vld [vmem:[%s6 + $0x28] sm:$0xff]
        %v445 = vld [vmem:[%s6 + $0x30] sm:$0xff]
        %v446 = vld [vmem:[%s6 + $0x38] sm:$0xff]
        %v447 = vld [vmem:[%s6 + $0x40] sm:$0xff]
        %v448 = vld [vmem:[%s6 + $0x48] sm:$0xff]
        %v449 = vld [vmem:[%s6 + $0x50] sm:$0xff]
        %v450 = vld [vmem:[%s6 + $0x58] sm:$0xff]
        %v451 = vld [vmem:[%s6 + $0x60] sm:$0xff]
        %v452 = vld [vmem:[%s6 + $0x68] sm:$0xff]
        %v453 = vld [vmem:[%s6 + $0x70] sm:$0xff]
        %v454 = vld [vmem:[%s6 + $0x78] sm:$0xff]
        %v455 = vld [vmem:[%s6 + $0x80] sm:$0xff]
        %v456 = vld [vmem:[%s6 + $0x88] sm:$0xff]
        %v457 = vld [vmem:[%s6 + $0x90] sm:$0xff]
        %v458 = vld [vmem:[%s6 + $0x98] sm:$0xff]
        %v459 = vld [vmem:[%s6 + $0xa0] sm:$0xff]
        %v460 = vld [vmem:[%s6 + $0xa8] sm:$0xff]
        %v461 = vld [vmem:[%s6 + $0xb0] sm:$0xff]
        %v462 = vld [vmem:[%s6 + $0xb8] sm:$0xff]
        %v463 = vld [vmem:[%s6 + $0xc0] sm:$0xff]
        %v464 = vld [vmem:[%s6 + $0xc8] sm:$0xff]
        %v465 = vld [vmem:[%s6 + $0xd0] sm:$0xff]
        %v466 = vld [vmem:[%s6 + $0xd8] sm:$0xff]
        %v467 = vld [vmem:[%s6 + $0xe0] sm:$0xff]
        %v468 = vld [vmem:[%s6 + $0xe8] sm:$0xff]
        %v469 = vld [vmem:[%s6 + $0xf0] sm:$0xff]
        %v470 = vld [vmem:[%s6 + $0xf8] sm:$0xff]
        %v471 = vld [vmem:[%s7] sm:$0x3]
        %v472 = vld [vmem:[%s8] sm:$0xff]
        %v473 = vld [vmem:[%s8 + $0x8] sm:$0xff]
        %v474 = vld [vmem:[%s8 + $0x10] sm:$0xff]
        %v475 = vld [vmem:[%s8 + $0x18] sm:$0xff]
        %v476 = vld [vmem:[%s8 + $0x20] sm:$0xff]
        %v477 = vld [vmem:[%s8 + $0x28] sm:$0xff]
        %v478 = vld [vmem:[%s8 + $0x30] sm:$0xff]
        %v479 = vld [vmem:[%s8 + $0x38] sm:$0xff]
        %v480 = vld [vmem:[%s8 + $0x40] sm:$0xff]
        %v481 = vld [vmem:[%s8 + $0x48] sm:$0xff]
        %v482 = vld [vmem:[%s8 + $0x50] sm:$0xff]
        %v483 = vld [vmem:[%s8 + $0x58] sm:$0xff]
        %v484 = vld [vmem:[%s8 + $0x60] sm:$0xff]
        %v485 = vld [vmem:[%s8 + $0x68] sm:$0xff]
        %v486 = vld [vmem:[%s8 + $0x70] sm:$0xff]
        %v487 = vld [vmem:[%s8 + $0x78] sm:$0xff]
        %v488 = vld [vmem:[%s8 + $0x80] sm:$0xff]
        %v489 = vld [vmem:[%s8 + $0x88] sm:$0xff]
        %v490 = vld [vmem:[%s8 + $0x90] sm:$0xff]
        %v491 = vld [vmem:[%s8 + $0x98] sm:$0xff]
        %v492 = vld [vmem:[%s8 + $0xa0] sm:$0xff]
        %v493 = vld [vmem:[%s8 + $0xa8] sm:$0xff]
        %v494 = vld [vmem:[%s8 + $0xb0] sm:$0xff]
        %v495 = vld [vmem:[%s8 + $0xb8] sm:$0xff]
        %v496 = vld [vmem:[%s8 + $0xc0] sm:$0xff]
        %v497 = vld [vmem:[%s8 + $0xc8] sm:$0xff]
        %v498 = vld [vmem:[%s8 + $0xd0] sm:$0xff]
        %v499 = vld [vmem:[%s8 + $0xd8] sm:$0xff]
        %v500 = vld [vmem:[%s8 + $0xe0] sm:$0xff]
        %v501 = vld [vmem:[%s8 + $0xe8] sm:$0xff]
        %v502 = vld [vmem:[%s8 + $0xf0] sm:$0xff]
        %v503 = vld [vmem:[%s8 + $0xf8] sm:$0xff]
        %v504 = vld [vmem:[%s9] sm:$0x1]
        %v506 = vperm.slane %v429, 0
        %vm508 = vcmask 23552
        %v510 = vsel %vm508, %v420, 0
        %v513 = vsel %vm508, %v421, 0
        %v516 = vsel %vm508, %v422, 0
        %v519 = vsel %vm508, %v423, 0
        %v522 = vsel %vm508, %v424, 0
        %v525 = vsel %vm508, %v425, 0
        %v528 = vsel %vm508, %v426, 0
        %v531 = vsel %vm508, %v427, 0
        %vm533 = vcmask 1042432
        %v535 = vsel %vm533, %v428, 0
        %537 = vmatpush.msra.mxu0 0.0
        %538 = vmatpush.msra.mxu0 0.0
        %539 = vmatpush.msra.mxu0 0.0
        %540 = vmatpush.msra.mxu0 0.0
        %541 = vmatpush.msra.mxu0 0.0
        %542 = vmatpush.msra.mxu0 0.0
        %543 = vmatpush.msra.mxu0 0.0
        %544 = vmatpush.msra.mxu0 0.0
        %545 = vmatpush.msra.mxu0 0.0
        %546 = vmatpush.msra.mxu0 0.0
        %547 = vmatpush.msra.mxu0 0.0
        %548 = vmatpush.msra.mxu0 0.0
        %549 = vmatpush.msra.mxu0 0.0
        %550 = vmatpush.msra.mxu0 0.0
        %551 = vmatpush.msra.mxu0 0.0
        %552 = vmatpush.msra.mxu0 %v535
        %553 = vmatmul.f32.gmra.mxu0 %v510
        %v554 = vpop.f32.mrf.mxu0
        %v555 = vadd.f32 %v506, %v554
        %556 = vmatmul.f32.gmra.mxu0 %v513
        %v557 = vpop.f32.mrf.mxu0
        %v558 = vadd.f32 %v506, %v557
        %559 = vmatmul.f32.gmra.mxu0 %v516
        %v560 = vpop.f32.mrf.mxu0
        %v561 = vadd.f32 %v506, %v560
        %562 = vmatmul.f32.gmra.mxu0 %v519
        %v563 = vpop.f32.mrf.mxu0
        %v564 = vadd.f32 %v506, %v563
        %565 = vmatmul.f32.gmra.mxu0 %v522
        %v566 = vpop.f32.mrf.mxu0
        %v567 = vadd.f32 %v506, %v566
        %568 = vmatmul.f32.gmra.mxu0 %v525
        %v569 = vpop.f32.mrf.mxu0
        %v570 = vadd.f32 %v506, %v569
        %571 = vmatmul.f32.gmra.mxu0 %v528
        %v572 = vpop.f32.mrf.mxu0
        %v573 = vadd.f32 %v506, %v572
        %574 = vmatmul.f32.gmra.mxu0 %v531
        %v575 = vpop.f32.mrf.mxu0
        %v576 = vadd.f32 %v506, %v575
        %577 = vdwg.mxu0
        %v578 = vmax.f32 %v555, 0.0
        %v579 = vmax.f32 %v558, 0.0
        %v580 = vmax.f32 %v561, 0.0
        %v581 = vmax.f32 %v564, 0.0
        %v582 = vmax.f32 %v567, 0.0
        %v583 = vmax.f32 %v570, 0.0
        %v584 = vmax.f32 %v573, 0.0
        %v585 = vmax.f32 %v576, 0.0
        %v587 = vperm.slane %v438, 0
        %vm589 = vcmask 523264
        %v591 = vsel %vm589, %v578, 0
        %v594 = vsel %vm589, %v579, 0
        %v597 = vsel %vm589, %v580, 0
        %v600 = vsel %vm589, %v581, 0
        %v603 = vsel %vm589, %v582, 0
        %v606 = vsel %vm589, %v583, 0
        %v609 = vsel %vm589, %v584, 0
        %v612 = vsel %vm589, %v585, 0
        %614 = vmatpush.msra.mxu0 0.0
        %615 = vmatpush.msra.mxu0 0.0
        %616 = vmatpush.msra.mxu0 0.0
        %617 = vmatpush.msra.mxu0 0.0
        %618 = vmatpush.msra.mxu0 0.0
        %619 = vmatpush.msra.mxu0 0.0
        %620 = vmatpush.msra.mxu0 0.0
        %621 = vmatpush.msra.mxu0 0.0
        %622 = vmatpush.msra.mxu0 %v437
        %623 = vmatpush.msra.mxu0 %v436
        %624 = vmatpush.msra.mxu0 %v435
        %625 = vmatpush.msra.mxu0 %v434
        %626 = vmatpush.msra.mxu0 %v433
        %627 = vmatpush.msra.mxu0 %v432
        %628 = vmatpush.msra.mxu0 %v431
        %629 = vmatpush.msra.mxu0 %v430
        %630 = vmatmul.f32.gmra.mxu0 %v591
        %v631 = vpop.f32.mrf.mxu0
        %v632 = vadd.f32 %v587, %v631
        %633 = vmatmul.f32.gmra.mxu0 %v594
        %v634 = vpop.f32.mrf.mxu0
        %v635 = vadd.f32 %v587, %v634
        %636 = vmatmul.f32.gmra.mxu0 %v597
        %v637 = vpop.f32.mrf.mxu0
        %v638 = vadd.f32 %v587, %v637
        %639 = vmatmul.f32.gmra.mxu0 %v600
        %v640 = vpop.f32.mrf.mxu0
        %v641 = vadd.f32 %v587, %v640
        %642 = vmatmul.f32.gmra.mxu0 %v603
        %v643 = vpop.f32.mrf.mxu0
        %v644 = vadd.f32 %v587, %v643
        %645 = vmatmul.f32.gmra.mxu0 %v606
        %v646 = vpop.f32.mrf.mxu0
        %v647 = vadd.f32 %v587, %v646
        %648 = vmatmul.f32.gmra.mxu0 %v609
        %v649 = vpop.f32.mrf.mxu0
        %v650 = vadd.f32 %v587, %v649
        %651 = vmatmul.f32.gmra.mxu0 %v612
        %v652 = vpop.f32.mrf.mxu0
        %v653 = vadd.f32 %v587, %v652
        %654 = vdwg.mxu0
        %v655 = vmax.f32 %v632, 0.0
        %v656 = vmax.f32 %v635, 0.0
        %v657 = vmax.f32 %v638, 0.0
        %v658 = vmax.f32 %v641, 0.0
        %v659 = vmax.f32 %v644, 0.0
        %v660 = vmax.f32 %v647, 0.0
        %v661 = vmax.f32 %v650, 0.0
        %v662 = vmax.f32 %v653, 0.0
        %v664 = vperm.slane %v471, 0
        %v665 = vperm.slane %v471, 1
        %668 = vmatpush.msra.mxu0 %v469
        %669 = vmatpush.msra.mxu0 %v467
        %670 = vmatpush.msra.mxu0 %v465
        %671 = vmatpush.msra.mxu0 %v463
        %672 = vmatpush.msra.mxu0 %v461
        %673 = vmatpush.msra.mxu0 %v459
        %674 = vmatpush.msra.mxu0 %v457
        %675 = vmatpush.msra.mxu0 %v455
        %676 = vmatpush.msra.mxu0 %v453
        %677 = vmatpush.msra.mxu0 %v451
        %678 = vmatpush.msra.mxu0 %v449
        %679 = vmatpush.msra.mxu0 %v447
        %680 = vmatpush.msra.mxu0 %v445
        %681 = vmatpush.msra.mxu0 %v443
        %682 = vmatpush.msra.mxu0 %v441
        %683 = vmatpush.msra.mxu0 %v439
        %684 = vmatmul.f32.gmra.mxu0 %v655
        %v685 = vpop.f32.mrf.mxu0
        %v686 = vadd.f32 %v664, %v685
        %687 = vmatmul.f32.gmra.mxu0 %v656
        %v688 = vpop.f32.mrf.mxu0
        %v689 = vadd.f32 %v664, %v688
        %690 = vmatmul.f32.gmra.mxu0 %v657
        %v691 = vpop.f32.mrf.mxu0
        %v692 = vadd.f32 %v664, %v691
        %693 = vmatmul.f32.gmra.mxu0 %v658
        %v694 = vpop.f32.mrf.mxu0
        %v695 = vadd.f32 %v664, %v694
        %696 = vmatmul.f32.gmra.mxu0 %v659
        %v697 = vpop.f32.mrf.mxu0
        %v698 = vadd.f32 %v664, %v697
        %699 = vmatmul.f32.gmra.mxu0 %v660
        %v700 = vpop.f32.mrf.mxu0
        %v701 = vadd.f32 %v664, %v700
        %702 = vmatmul.f32.gmra.mxu0 %v661
        %v703 = vpop.f32.mrf.mxu0
        %v704 = vadd.f32 %v664, %v703
        %705 = vmatmul.f32.gmra.mxu0 %v662
        %v706 = vpop.f32.mrf.mxu0
        %v707 = vadd.f32 %v664, %v706
        %708 = vdwg.mxu0
        %709 = vmatpush.msra.mxu0 %v470
        %710 = vmatpush.msra.mxu0 %v468
        %711 = vmatpush.msra.mxu0 %v466
        %712 = vmatpush.msra.mxu0 %v464
        %713 = vmatpush.msra.mxu0 %v462
        %714 = vmatpush.msra.mxu0 %v460
        %715 = vmatpush.msra.mxu0 %v458
        %716 = vmatpush.msra.mxu0 %v456
        %717 = vmatpush.msra.mxu0 %v454
        %718 = vmatpush.msra.mxu0 %v452
        %719 = vmatpush.msra.mxu0 %v450
        %720 = vmatpush.msra.mxu0 %v448
        %721 = vmatpush.msra.mxu0 %v446
        %722 = vmatpush.msra.mxu0 %v444
        %723 = vmatpush.msra.mxu0 %v442
        %724 = vmatpush.msra.mxu0 %v440
        %725 = vmatmul.f32.gmra.mxu0 %v655
        %v726 = vpop.f32.mrf.mxu0
        %v727 = vadd.f32 %v665, %v726
        %728 = vmatmul.f32.gmra.mxu0 %v656
        %v729 = vpop.f32.mrf.mxu0
        %v730 = vadd.f32 %v665, %v729
        %731 = vmatmul.f32.gmra.mxu0 %v657
        %v732 = vpop.f32.mrf.mxu0
        %v733 = vadd.f32 %v665, %v732
        %734 = vmatmul.f32.gmra.mxu0 %v658
        %v735 = vpop.f32.mrf.mxu0
        %v736 = vadd.f32 %v665, %v735
        %737 = vmatmul.f32.gmra.mxu0 %v659
        %v738 = vpop.f32.mrf.mxu0
        %v739 = vadd.f32 %v665, %v738
        %740 = vmatmul.f32.gmra.mxu0 %v660
        %v741 = vpop.f32.mrf.mxu0
        %v742 = vadd.f32 %v665, %v741
        %743 = vmatmul.f32.gmra.mxu0 %v661
        %v744 = vpop.f32.mrf.mxu0
        %v745 = vadd.f32 %v665, %v744
        %746 = vmatmul.f32.gmra.mxu0 %v662
        %v747 = vpop.f32.mrf.mxu0
        %v748 = vadd.f32 %v665, %v747
        %749 = vdwg.mxu0
        %v750 = vmax.f32 %v686, 0.0
        %v751 = vmax.f32 %v727, 0.0
        %v752 = vmax.f32 %v689, 0.0
        %v753 = vmax.f32 %v730, 0.0
        %v754 = vmax.f32 %v692, 0.0
        %v755 = vmax.f32 %v733, 0.0
        %v756 = vmax.f32 %v695, 0.0
        %v757 = vmax.f32 %v736, 0.0
        %v758 = vmax.f32 %v698, 0.0
        %v759 = vmax.f32 %v739, 0.0
        %v760 = vmax.f32 %v701, 0.0
        %v761 = vmax.f32 %v742, 0.0
        %v762 = vmax.f32 %v704, 0.0
        %v763 = vmax.f32 %v745, 0.0
        %v764 = vmax.f32 %v707, 0.0
        %v765 = vmax.f32 %v748, 0.0
        %v767 = vperm.slane %v504, 0
        %769 = vmatpush.msra.mxu0 %v487
        %770 = vmatpush.msra.mxu0 %v486
        %771 = vmatpush.msra.mxu0 %v485
        %772 = vmatpush.msra.mxu0 %v484
        %773 = vmatpush.msra.mxu0 %v483
        %774 = vmatpush.msra.mxu0 %v482
        %775 = vmatpush.msra.mxu0 %v481
        %776 = vmatpush.msra.mxu0 %v480
        %777 = vmatpush.msra.mxu0 %v479
        %778 = vmatpush.msra.mxu0 %v478
        %779 = vmatpush.msra.mxu0 %v477
        %780 = vmatpush.msra.mxu0 %v476
        %781 = vmatpush.msra.mxu0 %v475
        %782 = vmatpush.msra.mxu0 %v474
        %783 = vmatpush.msra.mxu0 %v473
        %784 = vmatpush.msra.mxu0 %v472
        %785 = vmatmul.f32.gmra.mxu0 %v750
        %v786 = vpop.f32.mrf.mxu0
        %v787 = vadd.f32 %v767, %v786
        %788 = vmatmul.f32.gmra.mxu0 %v752
        %v789 = vpop.f32.mrf.mxu0
        %v790 = vadd.f32 %v767, %v789
        %791 = vmatmul.f32.gmra.mxu0 %v754
        %v792 = vpop.f32.mrf.mxu0
        %v793 = vadd.f32 %v767, %v792
        %794 = vmatmul.f32.gmra.mxu0 %v756
        %v795 = vpop.f32.mrf.mxu0
        %v796 = vadd.f32 %v767, %v795
        %797 = vmatmul.f32.gmra.mxu0 %v758
        %v798 = vpop.f32.mrf.mxu0
        %v799 = vadd.f32 %v767, %v798
        %800 = vmatmul.f32.gmra.mxu0 %v760
        %v801 = vpop.f32.mrf.mxu0
        %v802 = vadd.f32 %v767, %v801
        %803 = vmatmul.f32.gmra.mxu0 %v762
        %v804 = vpop.f32.mrf.mxu0
        %v805 = vadd.f32 %v767, %v804
        %806 = vmatmul.f32.gmra.mxu0 %v764
        %v807 = vpop.f32.mrf.mxu0
        %v808 = vadd.f32 %v767, %v807
        %809 = vdwg.mxu0
        %810 = vmatpush.msra.mxu0 %v503
        %811 = vmatpush.msra.mxu0 %v502
        %812 = vmatpush.msra.mxu0 %v501
        %813 = vmatpush.msra.mxu0 %v500
        %814 = vmatpush.msra.mxu0 %v499
        %815 = vmatpush.msra.mxu0 %v498
        %816 = vmatpush.msra.mxu0 %v497
        %817 = vmatpush.msra.mxu0 %v496
        %818 = vmatpush.msra.mxu0 %v495
        %819 = vmatpush.msra.mxu0 %v494
        %820 = vmatpush.msra.mxu0 %v493
        %821 = vmatpush.msra.mxu0 %v492
        %822 = vmatpush.msra.mxu0 %v491
        %823 = vmatpush.msra.mxu0 %v490
        %824 = vmatpush.msra.mxu0 %v489
        %825 = vmatpush.msra.mxu0 %v488
        %826 = vmatmul.f32.gmra.mxu0 %v751
        %v827 = vpop.f32.mrf.mxu0
        %v828 = vadd.f32 %v787, %v827
        %829 = vmatmul.f32.gmra.mxu0 %v753
        %v830 = vpop.f32.mrf.mxu0
        %v831 = vadd.f32 %v790, %v830
        %832 = vmatmul.f32.gmra.mxu0 %v755
        %v833 = vpop.f32.mrf.mxu0
        %v834 = vadd.f32 %v793, %v833
        %835 = vmatmul.f32.gmra.mxu0 %v757
        %v836 = vpop.f32.mrf.mxu0
        %v837 = vadd.f32 %v796, %v836
        %838 = vmatmul.f32.gmra.mxu0 %v759
        %v839 = vpop.f32.mrf.mxu0
        %v840 = vadd.f32 %v799, %v839
        %841 = vmatmul.f32.gmra.mxu0 %v761
        %v842 = vpop.f32.mrf.mxu0
        %v843 = vadd.f32 %v802, %v842
        %844 = vmatmul.f32.gmra.mxu0 %v763
        %v845 = vpop.f32.mrf.mxu0
        %v846 = vadd.f32 %v805, %v845
        %847 = vmatmul.f32.gmra.mxu0 %v765
        %v848 = vpop.f32.mrf.mxu0
        %v849 = vadd.f32 %v808, %v848
        %850 = vdwg.mxu0
        %v851 = vld [vmem:[%s413] sm:$0xf]
        %v852 = vld [vmem:[%s396] sm:$0xf]
        %v854 = vsel %vm589, %v851, 0
        %856 = vmatpush.msra.mxu0 0.0
        %857 = vmatpush.msra.mxu0 0.0
        %858 = vmatpush.msra.mxu0 0.0
        %859 = vmatpush.msra.mxu0 0.0
        %860 = vmatpush.msra.mxu0 0.0
        %861 = vmatpush.msra.mxu0 0.0
        %862 = vmatpush.msra.mxu0 0.0
        %863 = vmatpush.msra.mxu0 0.0
        %864 = vmatpush.msra.mxu0 %v849
        %865 = vmatpush.msra.mxu0 %v846
        %866 = vmatpush.msra.mxu0 %v843
        %867 = vmatpush.msra.mxu0 %v840
        %868 = vmatpush.msra.mxu0 %v837
        %869 = vmatpush.msra.mxu0 %v834
        %870 = vmatpush.msra.mxu0 %v831
        %871 = vmatpush.msra.mxu0 %v828
        %872 = vmatmul.f32.gmra.mxu0 %v854
        %v873 = vpop.f32.mrf.mxu0
        %v874 = vadd.f32 0.0, %v873
        %875 = vdwg.mxu0
        %v876 = vadd.f32 %v852, %v874
        %vm877 = vcmask 257024
        %878 = vst.msk [vmem:[%s396] sm:$0xf] %vm877, %v876
        %s879 = sand.u32 %s268, 1
        %s880 = scalar_lea.sflag [#allocation3], %s879
        %s881 = sand.u32 %s268, 1
        %s882 = smul.addr %s881, 4
        %s883 = scalar_lea.vmem [#allocation2], %s882
        // Predicated region
        $region65: #{tpu_custom_call.1} parent=59 // pred_check
          %p884 = pneg %p278
        $region66: #{tpu_custom_call.1} parent=59 // pred_check_branch
          %886 = sbr.rel (%p884) target = $region68
        $region67: #{tpu_custom_call.1} parent=59 // pred_region
          %888 = vsyncadd %s880, 0
          %s889 = smul.addr %s28, 4
          %s890 = scalar_lea.hbm %s10, %s889
          %s892 = sshll.u32 %s883, 4
          %s893 = int_to_ptr.vmem [resolvable:$true] %s892
          %s894 = sshll.u32 %s890, 4
          %s895 = int_to_ptr.hbm [resolvable:$true] %s894
          %897 = dma.vmem_to_hbm [thread:$0]  %s893, 64, %s895, %s880
        $region68: #{tpu_custom_call.1} parent=59 // pred_fallthru
          _
      $region60: #{tpu_custom_call.1} parent=5 // pred_fallthru
        _
      %p898 = scmp.le.s32.totalorder 2, %s19
      // Predicated region
      $region69: #{tpu_custom_call.1} parent=5 // pred_check
        %p899 = pneg %p898
      $region70: #{tpu_custom_call.1} parent=5 // pred_check_branch
        %901 = sbr.rel (%p899) target = $region72
      $region71: #{tpu_custom_call.1} parent=5 // pred_region
        %s902 = ssub.s32 %s19, 2
        // Predicated region
        $region73: #{tpu_custom_call.1} parent=71 // pred_check
          %p903 = pneg %p284
        $region74: #{tpu_custom_call.1} parent=71 // pred_check_branch
          %905 = sbr.rel (%p903) target = $region76
        $region75: #{tpu_custom_call.1} parent=71 // pred_region
          %s906 = sand.u32 %s269, 1
          %s907 = scalar_lea.sflag [#allocation3], %s906
          %s908 = sand.u32 %s269, 1
          %s909 = smul.addr %s908, 4
          %s910 = scalar_lea.vmem [#allocation2], %s909
          %912 = dma.done %s907, 64
        $region76: #{tpu_custom_call.1} parent=71 // pred_fallthru
          _
      $region72: #{tpu_custom_call.1} parent=5 // pred_fallthru
        _
    $region6: #{tpu_custom_call.1} parent=1 // loop_footer
      %s23 = sadd.s32 1, %s19
    $region7: #{tpu_custom_call.1} parent=1 // loop_footer_branch
      %18 = sbr.rel target = $region3
    $region8: #{tpu_custom_call.1} parent=1 // loop_exit
      _
    %913 = vsyncpa [#allocation3], 1
    %s914 = scalar_lea.sflag [#allocation3], 1
    %915 = vsyncpa %s914, 1

</llo_original>
